<compile_context>
chip_gen: v7x
topology: tpu7x:2x2x1
jax: 0.10.0
libtpu: 0.0.40
codegen_flags: <defaults>
</compile_context>

<pallas_src>
import numpy as np
import jax
import jax.numpy as jnp
from jax.experimental import pallas as pl
from jax.experimental.pallas import tpu as pltpu

MAX_LEN = 64   # max_len from module __init__
HIDDEN = 32    # hidden_size from module __init__
GROUP = 4      # pe rows gathered per output-tile row -> lane width GROUP*HIDDEN = 128


def build_pe(max_len: int, hidden: int) -> jnp.ndarray:
    """Deterministic parameter init, identical to the module's __init__."""
    pe = np.zeros((max_len, hidden), dtype=np.float64)
    position = np.arange(0, max_len, dtype=np.float32)[:, None]
    div_term = np.exp(np.arange(0, hidden, 2) * (-np.log(10000.0) / hidden))
    pe[:, 0::2] = np.sin(position * div_term)
    pe[:, 1::2] = np.cos(position * div_term)
    return jnp.asarray(pe, dtype=jnp.float32)


def _round_up(x: int, m: int) -> int:
    return ((x + m - 1) // m) * m


def _gather_kernel(ts_ref, pe_rep_ref, out_ref):
    # ts_ref    : VMEM int32 (M, GROUP)                    -- GROUP timesteps per output row
    # pe_rep_ref: VMEM f32   (GROUP*MAX_LEN, GROUP*HIDDEN) -- block-diagonal pe, resident
    # out_ref   : VMEM f32   (M, GROUP*HIDDEN)             -- natural row-major, lane-dense
    gk, _ = pe_rep_ref.shape
    m, groups = ts_ref.shape
    max_len = gk // groups

    ts = ts_ref[...]
    # torch's pe[timestep] wraps negative indices; clamp the rest defensively.
    ts = jnp.where(ts < 0, ts + max_len, ts)
    ts = jnp.clip(ts, 0, max_len - 1)

    # Grouped one-hot (M, GROUP*MAX_LEN): row r has a single 1 in each group's
    # column block, at column g*max_len + ts[r, g]. Built from GROUP disjoint
    # per-group compares (pure VPU work, hidden under the MXU matmul).
    col = jax.lax.broadcasted_iota(jnp.int32, (m, gk), 1)
    onehot = jnp.zeros((m, gk), jnp.float32)
    for g in range(groups):
        onehot = onehot + (col == (g * max_len + ts[:, g:g + 1])).astype(jnp.float32)

    # One MXU matmul performs the whole gather for the tile; output is already in
    # natural row-major order, so no transpose is needed anywhere.
    out_ref[...] = jnp.dot(
        onehot, pe_rep_ref[...],
        preferred_element_type=jnp.float32,
        precision=jax.lax.Precision.HIGHEST,   # exact f32 gather -- do not lower
    )


def _pallas_gather(pe: jnp.ndarray, ts_flat: jnp.ndarray) -> jnp.ndarray:
    """Returns pe[ts_flat] (shape (n, hidden)) via the Pallas one-hot MXU gather."""
    max_len, hidden = pe.shape
    n = ts_flat.shape[0]

    # Block-diagonal replicated table (256, 128). One tiny op; constant-folds
    # under jit when pe is a constant (would live in module __init__ in practice).
    pe_rep = jnp.kron(jnp.eye(GROUP, dtype=pe.dtype), pe)

    n128 = _round_up(max(n, 1), 128)
    if n128 <= 1024:
        blk = n128                                           # single grid step
    else:
        # >= 2 grid steps so v7x megacore can split the "parallel" axis; cap 2048.
        blk = min(2048, _round_up(pl.cdiv(n128, 2), 128))
    n_pad = _round_up(n128, blk)

    ts_pad = ts_flat
    if n_pad != n:
        ts_pad = jnp.pad(ts_flat, (0, n_pad - n))            # padded rows sliced off below
    ts2d = ts_pad.reshape(n_pad // GROUP, GROUP)              # free row-major reshape

    m_blk = blk // GROUP
    cost = pl.CostEstimate(
        flops=int(2 * (GROUP * max_len) * (GROUP * hidden) * (n_pad // GROUP) * 6),
        transcendentals=0,
        bytes_accessed=int(4 * (n_pad
                                + GROUP * max_len * GROUP * hidden
                                + n_pad * hidden)),
    )

    out2d = pl.pallas_call(
        _gather_kernel,
        out_shape=jax.ShapeDtypeStruct((n_pad // GROUP, GROUP * hidden), pe.dtype),
        grid=(n_pad // blk,),
        in_specs=[
            pl.BlockSpec((m_blk, GROUP), lambda i: (i, 0)),                   # timesteps
            pl.BlockSpec((GROUP * max_len, GROUP * hidden), lambda i: (0, 0)),  # pe_rep
        ],
        out_specs=pl.BlockSpec((m_blk, GROUP * hidden), lambda i: (i, 0)),
        compiler_params=pltpu.CompilerParams(
            dimension_semantics=("parallel",),   # no carried state; v7x: 2 TCs
        ),
        cost_estimate=cost,
    )(ts2d, pe_rep)

    # Free reshape (row-major contiguous) -- no transpose kernel, no extra HBM pass.
    return out2d.reshape(n_pad, hidden)[:n]


def sine_positional_encoding(pe: jnp.ndarray, timestep: jnp.ndarray,
                             *, min_pallas_elems: int = 2048,
                             force_pallas: bool = False) -> jnp.ndarray:
    """Returns pe[timestep]; output shape = timestep.shape + (hidden,)."""
    max_len, hidden = pe.shape
    orig_shape = timestep.shape
    ts_flat = jnp.ravel(timestep).astype(jnp.int32)
    n = ts_flat.shape[0]

    if (not force_pallas) and n < min_pallas_elems:
        # Tiny gathers are launch-overhead bound: plain fused XLA gather wins.
        t = jnp.where(ts_flat < 0, ts_flat + max_len, ts_flat)
        t = jnp.clip(t, 0, max_len - 1)
        out = pe[t]
    else:
        out = _pallas_gather(pe, ts_flat)

    return out.reshape(*orig_shape, hidden)


if __name__ == "__main__":
    key = jax.random.PRNGKey(0)
    batch, seq = 2, 8
    timestep = jax.random.randint(key, (batch, seq), 0, MAX_LEN, dtype=jnp.int32)

    pe = build_pe(MAX_LEN, HIDDEN)

    # Force the Pallas path so the kernel itself is exercised at the demo shape.
    out = sine_positional_encoding(pe, timestep, force_pallas=True)
    out = jax.block_until_ready(out)

    # reference: plain JAX gather (== torch's self.pe[timestep])
    ref = pe[timestep]
    assert out.shape == (batch, seq, HIDDEN), out.shape
    assert out.dtype == jnp.float32
    np.testing.assert_allclose(np.asarray(out), np.asarray(ref), rtol=1e-6, atol=1e-6)

    # Production default for tiny n takes the XLA fast path; also check it.
    out_fast = jax.block_until_ready(sine_positional_encoding(pe, timestep))
    np.testing.assert_allclose(np.asarray(out_fast), np.asarray(ref), rtol=1e-6, atol=1e-6)

    print("KERNEL_OK")
</pallas_src>

<mosaic_0001>
module attributes {stable_mosaic.version = 11 : i64} {
  func.func @_gather_kernel(%arg0: i32, %arg1: memref<32x4xi32, #tpu.memory_space<vmem>>, %arg2: memref<256x128xf32, #tpu.memory_space<vmem>>, %arg3: memref<32x128xf32, #tpu.memory_space<vmem>>) attributes {dimension_semantics = [#tpu.dimension_semantics<parallel>], iteration_bounds = array<i64: 1>, scalar_prefetch = 0 : i64, scratch_operands = 0 : i64, tpu.core_type = #tpu.core_type<tc>, window_params = [{transform_indices = @transform_0, window_bounds = array<i64: 32, 4>}, {pipeline_mode = #tpu.pipeline_mode<synchronous>, transform_indices = @transform_1, window_bounds = array<i64: 256, 128>}, {transform_indices = @transform_2, window_bounds = array<i64: 32, 128>}]} {
    %c0 = arith.constant 0 : index
    %c0_0 = arith.constant 0 : index
    %0 = vector.load %arg1[%c0, %c0_0] : memref<32x4xi32, #tpu.memory_space<vmem>>, vector<32x4xi32>
    %c0_i32 = arith.constant 0 : i32
    %1 = vector.broadcast %c0_i32 : i32 to vector<32x4xi32>
    %2 = arith.cmpi slt, %0, %1 : vector<32x4xi32>
    %c64_i32 = arith.constant 64 : i32
    %3 = vector.broadcast %c64_i32 : i32 to vector<32x4xi32>
    %4 = arith.addi %0, %3 : vector<32x4xi32>
    %5 = arith.select %2, %4, %0 : vector<32x4xi1>, vector<32x4xi32>
    %c0_i32_1 = arith.constant 0 : i32
    %c63_i32 = arith.constant 63 : i32
    %6 = vector.broadcast %c0_i32_1 : i32 to vector<32x4xi32>
    %7 = arith.maxsi %6, %5 : vector<32x4xi32>
    %8 = vector.broadcast %c63_i32 : i32 to vector<32x4xi32>
    %9 = arith.minsi %8, %7 : vector<32x4xi32>
    %10 = tpu.iota {dimensions = array<i32: 1>} : vector<32x256xi32>
    %cst = arith.constant 0.000000e+00 : f32
    %11 = vector.broadcast %cst : f32 to vector<32x256xf32>
    %12 = vector.extract_strided_slice %9 {offsets = [0, 0], sizes = [32, 1], strides = [1, 1]} : vector<32x4xi32> to vector<32x1xi32>
    %c0_i32_2 = arith.constant 0 : i32
    %13 = vector.broadcast %c0_i32_2 : i32 to vector<32x1xi32>
    %14 = arith.addi %13, %12 : vector<32x1xi32>
    %15 = vector.broadcast %14 : vector<32x1xi32> to vector<32x256xi32>
    %16 = arith.cmpi eq, %10, %15 : vector<32x256xi32>
    %17 = arith.extui %16 : vector<32x256xi1> to vector<32x256xi32>
    %18 = arith.sitofp %17 : vector<32x256xi32> to vector<32x256xf32>
    %19 = arith.addf %11, %18 : vector<32x256xf32>
    %20 = vector.extract_strided_slice %9 {offsets = [0, 1], sizes = [32, 1], strides = [1, 1]} : vector<32x4xi32> to vector<32x1xi32>
    %c64_i32_3 = arith.constant 64 : i32
    %21 = vector.broadcast %c64_i32_3 : i32 to vector<32x1xi32>
    %22 = arith.addi %21, %20 : vector<32x1xi32>
    %23 = vector.broadcast %22 : vector<32x1xi32> to vector<32x256xi32>
    %24 = arith.cmpi eq, %10, %23 : vector<32x256xi32>
    %25 = arith.extui %24 : vector<32x256xi1> to vector<32x256xi32>
    %26 = arith.sitofp %25 : vector<32x256xi32> to vector<32x256xf32>
    %27 = arith.addf %19, %26 : vector<32x256xf32>
    %28 = vector.extract_strided_slice %9 {offsets = [0, 2], sizes = [32, 1], strides = [1, 1]} : vector<32x4xi32> to vector<32x1xi32>
    %c128_i32 = arith.constant 128 : i32
    %29 = vector.broadcast %c128_i32 : i32 to vector<32x1xi32>
    %30 = arith.addi %29, %28 : vector<32x1xi32>
    %31 = vector.broadcast %30 : vector<32x1xi32> to vector<32x256xi32>
    %32 = arith.cmpi eq, %10, %31 : vector<32x256xi32>
    %33 = arith.extui %32 : vector<32x256xi1> to vector<32x256xi32>
    %34 = arith.sitofp %33 : vector<32x256xi32> to vector<32x256xf32>
    %35 = arith.addf %27, %34 : vector<32x256xf32>
    %36 = vector.extract_strided_slice %9 {offsets = [0, 3], sizes = [32, 1], strides = [1, 1]} : vector<32x4xi32> to vector<32x1xi32>
    %c192_i32 = arith.constant 192 : i32
    %37 = vector.broadcast %c192_i32 : i32 to vector<32x1xi32>
    %38 = arith.addi %37, %36 : vector<32x1xi32>
    %39 = vector.broadcast %38 : vector<32x1xi32> to vector<32x256xi32>
    %40 = arith.cmpi eq, %10, %39 : vector<32x256xi32>
    %41 = arith.extui %40 : vector<32x256xi1> to vector<32x256xi32>
    %42 = arith.sitofp %41 : vector<32x256xi32> to vector<32x256xf32>
    %43 = arith.addf %35, %42 : vector<32x256xf32>
    %c0_4 = arith.constant 0 : index
    %c0_5 = arith.constant 0 : index
    %44 = vector.load %arg2[%c0_4, %c0_5] : memref<256x128xf32, #tpu.memory_space<vmem>>, vector<256x128xf32>
    %cst_6 = arith.constant dense<0.000000e+00> : vector<32x128xf32>
    %45 = tpu.matmul %43, %44, %cst_6 {dimension_numbers = #tpu.dot_dimension_numbers<[1], [0], [0], [1], [0, 0, 1, 1], [], []>, precision = #tpu.contract_precision<fp32>} : vector<32x256xf32>, vector<256x128xf32>, vector<32x128xf32> -> vector<32x128xf32>
    %c0_7 = arith.constant 0 : index
    %c0_8 = arith.constant 0 : index
    %46 = vector.load %arg3[%c0_7, %c0_8] : memref<32x128xf32, #tpu.memory_space<vmem>>, vector<32x128xf32>
    tpu.vector_store %arg3[%c0_7, %c0_8], %45 {strides = array<i32>} : memref<32x128xf32, #tpu.memory_space<vmem>>, vector<32x128xf32>,
    return
  }
  func.func @transform_0(%arg0: i32) -> (i32, i32) {
    %c0_i32 = arith.constant 0 : i32
    %c0_i32_0 = arith.constant 0 : i32
    return %arg0, %c0_i32 : i32, i32
  }
  func.func @transform_1(%arg0: i32) -> (i32, i32) {
    %c0_i32 = arith.constant 0 : i32
    %c0_i32_0 = arith.constant 0 : i32
    %c0_i32_1 = arith.constant 0 : i32
    return %c0_i32, %c0_i32_0 : i32, i32
  }
  func.func @transform_2(%arg0: i32) -> (i32, i32) {
    %c0_i32 = arith.constant 0 : i32
    %c0_i32_0 = arith.constant 0 : i32
    return %arg0, %c0_i32 : i32, i32
  }
}

</mosaic_0001>

<llo_original>
// kernel: tpu_custom_call.1
$region0: #{tpu_custom_call.1}
  #allocation0 [shape = 'u32[]', space=smem, size = 0x4, offset = 0x4, fixed_abs, tag = 'smem constant byte address 0x4 - core index']
  #allocation1 [shape = 'u32[144,128]{1,0:T(1,128)}', space=vmem, size = 0x12000, scoped, tag = 'internal scratch']
  %s0 = inlined_call_operand.vmem [shape: s32[32,4], index: 0, kind: input, shape index: {}]
  %s1 = inlined_call_operand.hbm [shape: f32[256,128], index: 1, kind: input, shape index: {}]
  %s2 = inlined_call_operand.hbm [shape: f32[32,128], index: 2, kind: output, shape index: {}]
  %s3 = sld [smem:[#allocation0]]
  $region22: #{tpu_custom_call.1} parent=0
    _
  %s5 = ssub.s32 1, %s3
  %s6 = scalar_select 0, %s5, %s3
  $region1: #{tpu_custom_call.1} parent=0
    #allocation2 [shape = 'u8[131072]{0}', space=vmem, size = 0x20000, scoped, tag = 'input window, operand 1, single buffered']
    #allocation3 [shape = 's32[1]{0}', space=sflag, size = 0x4, scoped, tag = 'scoped memory for tpu_custom_call.1']
    #allocation4 [shape = 's32[1]{0}', space=sflag, size = 0x4, scoped, tag = 'scoped memory for tpu_custom_call.1']
    #allocation5 [shape = 'u8[16384]{0}', space=vmem, size = 0x4000, scoped, tag = 'output window, operand 0, single buffered']
    %7 = vsyncpa [#allocation3], 0
    %8 = vsyncpa [#allocation4], 0
    // Predicated region
    $region2: #{tpu_custom_call.1} parent=1 // pred_check
      _
    $region3: #{tpu_custom_call.1} parent=1 // pred_check_branch
      %10 = sbr.rel (0) target = $region5
    $region4: #{tpu_custom_call.1} parent=1 // pred_region
      _
    $region5: #{tpu_custom_call.1} parent=1 // pred_fallthru
      _
    // Predicated region
    $region6: #{tpu_custom_call.1} parent=1 // pred_check
      _
    $region7: #{tpu_custom_call.1} parent=1 // pred_check_branch
      %12 = sbr.rel (0) target = $region9
    $region8: #{tpu_custom_call.1} parent=1 // pred_region
      %s14 = ssub.s32 4096, 4096
      %15 = vsyncadd [#allocation3], %s14
      %s16 = sshll.u32 [#allocation2], 4
      %s17 = int_to_ptr.vmem [resolvable:$true] %s16
      %22 = dma.hbm_to_vmem [thread:$0]  %s1, 4096, %s17, [#allocation3], 128, 128, 8
    $region9: #{tpu_custom_call.1} parent=1 // pred_fallthru
      _
    // Predicated region
    $region10: #{tpu_custom_call.1} parent=1 // pred_check
      _
    $region11: #{tpu_custom_call.1} parent=1 // pred_check_branch
      %24 = sbr.rel (0) target = $region13
    $region12: #{tpu_custom_call.1} parent=1 // pred_region
      %25 = dma.done [#allocation3], 4096
    $region13: #{tpu_custom_call.1} parent=1 // pred_fallthru
      _
    %v26 = vld [vmem:[%s0] sm:$0xff]
    %v27 = vld [vmem:[%s0 + $0x8] sm:$0xff]
    %v28 = vld [vmem:[%s0 + $0x10] sm:$0xff]
    %v29 = vld [vmem:[%s0 + $0x18] sm:$0xff]
    %vm30 = vcmp.lt.s32.totalorder %v26, 0
    %vm31 = vcmp.lt.s32.totalorder %v27, 0
    %vm32 = vcmp.lt.s32.totalorder %v28, 0
    %vm33 = vcmp.lt.s32.totalorder %v29, 0
    %v34 = vadd.s32 %v26, 64
    %v35 = vadd.s32 %v27, 64
    %v36 = vadd.s32 %v28, 64
    %v37 = vadd.s32 %v29, 64
    %v38 = vsel %vm30, %v34, %v26
    %v39 = vsel %vm31, %v35, %v27
    %v40 = vsel %vm32, %v36, %v28
    %v41 = vsel %vm33, %v37, %v29
    %vm42 = vcmp.gt.s32.totalorder %v38, 0
    %v43 = vsel %vm42, %v38, 0
    %vm44 = vcmp.gt.s32.totalorder %v39, 0
    %v45 = vsel %vm44, %v39, 0
    %vm46 = vcmp.gt.s32.totalorder %v40, 0
    %v47 = vsel %vm46, %v40, 0
    %vm48 = vcmp.gt.s32.totalorder %v41, 0
    %v49 = vsel %vm48, %v41, 0
    %vm50 = vcmp.lt.s32.totalorder %v43, 63
    %v51 = vsel %vm50, %v43, 63
    %vm52 = vcmp.lt.s32.totalorder %v45, 63
    %v53 = vsel %vm52, %v45, 63
    %vm54 = vcmp.lt.s32.totalorder %v47, 63
    %v55 = vsel %vm54, %v47, 63
    %vm56 = vcmp.lt.s32.totalorder %v49, 63
    %v57 = vsel %vm56, %v49, 63
    %v58 = vlaneseq
    %v59 = vand.u32 %v58, 127
    %v60 = vadd.s32 %v59, 128
    %61 = vset.pattern.permute.xlu0 0
    %62 = vperm.xlu0 %61, %v51
    %v63 = vpop.permute.xlu0 %62
    %64 = vset.pattern.permute.xlu0 0
    %65 = vperm.xlu0 %64, %v53
    %v66 = vpop.permute.xlu0 %65
    %67 = vset.pattern.permute.xlu0 0
    %68 = vperm.xlu0 %67, %v55
    %v69 = vpop.permute.xlu0 %68
    %70 = vset.pattern.permute.xlu0 0
    %71 = vperm.xlu0 %70, %v57
    %v72 = vpop.permute.xlu0 %71
    %vm73 = vcmp.eq.s32.totalorder %v59, %v63
    %vm74 = vcmp.eq.s32.totalorder %v60, %v63
    %vm75 = vcmp.eq.s32.totalorder %v59, %v66
    %vm76 = vcmp.eq.s32.totalorder %v60, %v66
    %vm77 = vcmp.eq.s32.totalorder %v59, %v69
    %vm78 = vcmp.eq.s32.totalorder %v60, %v69
    %vm79 = vcmp.eq.s32.totalorder %v59, %v72
    %vm80 = vcmp.eq.s32.totalorder %v60, %v72
    %v81 = vsel %vm73, 1, 0
    %v82 = vsel %vm74, 1, 0
    %v83 = vsel %vm75, 1, 0
    %v84 = vsel %vm76, 1, 0
    %v85 = vsel %vm77, 1, 0
    %v86 = vsel %vm78, 1, 0
    %v87 = vsel %vm79, 1, 0
    %v88 = vsel %vm80, 1, 0
    %v89 = vcvt.s32.f32 %v81
    %v90 = vcvt.s32.f32 %v82
    %v91 = vcvt.s32.f32 %v83
    %v92 = vcvt.s32.f32 %v84
    %v93 = vcvt.s32.f32 %v85
    %v94 = vcvt.s32.f32 %v86
    %v95 = vcvt.s32.f32 %v87
    %v96 = vcvt.s32.f32 %v88
    %v97 = vadd.f32 %v89, 0.0
    %v98 = vadd.f32 %v90, 0.0
    %v99 = vadd.f32 %v91, 0.0
    %v100 = vadd.f32 %v92, 0.0
    %v101 = vadd.f32 %v93, 0.0
    %v102 = vadd.f32 %v94, 0.0
    %v103 = vadd.f32 %v95, 0.0
    %v104 = vadd.f32 %v96, 0.0
    %v105 = vadd.s32 %v51, 64
    %v106 = vadd.s32 %v53, 64
    %v107 = vadd.s32 %v55, 64
    %v108 = vadd.s32 %v57, 64
    %109 = vset.pattern.permute.xlu0 1
    %110 = vperm.xlu0 %109, %v105
    %v111 = vpop.permute.xlu0 %110
    %112 = vset.pattern.permute.xlu0 1
    %113 = vperm.xlu0 %112, %v106
    %v114 = vpop.permute.xlu0 %113
    %115 = vset.pattern.permute.xlu0 1
    %116 = vperm.xlu0 %115, %v107
    %v117 = vpop.permute.xlu0 %116
    %118 = vset.pattern.permute.xlu0 1
    %119 = vperm.xlu0 %118, %v108
    %v120 = vpop.permute.xlu0 %119
    %vm121 = vcmp.eq.s32.totalorder %v59, %v111
    %vm122 = vcmp.eq.s32.totalorder %v60, %v111
    %vm123 = vcmp.eq.s32.totalorder %v59, %v114
    %vm124 = vcmp.eq.s32.totalorder %v60, %v114
    %vm125 = vcmp.eq.s32.totalorder %v59, %v117
    %vm126 = vcmp.eq.s32.totalorder %v60, %v117
    %vm127 = vcmp.eq.s32.totalorder %v59, %v120
    %vm128 = vcmp.eq.s32.totalorder %v60, %v120
    %v129 = vsel %vm121, 1, 0
    %v130 = vsel %vm122, 1, 0
    %v131 = vsel %vm123, 1, 0
    %v132 = vsel %vm124, 1, 0
    %v133 = vsel %vm125, 1, 0
    %v134 = vsel %vm126, 1, 0
    %v135 = vsel %vm127, 1, 0
    %v136 = vsel %vm128, 1, 0
    %v137 = vcvt.s32.f32 %v129
    %v138 = vcvt.s32.f32 %v130
    %v139 = vcvt.s32.f32 %v131
    %v140 = vcvt.s32.f32 %v132
    %v141 = vcvt.s32.f32 %v133
    %v142 = vcvt.s32.f32 %v134
    %v143 = vcvt.s32.f32 %v135
    %v144 = vcvt.s32.f32 %v136
    %v145 = vadd.f32 %v97, %v137
    %v146 = vadd.f32 %v98, %v138
    %v147 = vadd.f32 %v99, %v139
    %v148 = vadd.f32 %v100, %v140
    %v149 = vadd.f32 %v101, %v141
    %v150 = vadd.f32 %v102, %v142
    %v151 = vadd.f32 %v103, %v143
    %v152 = vadd.f32 %v104, %v144
    %v153 = vadd.s32 %v51, 128
    %v154 = vadd.s32 %v53, 128
    %v155 = vadd.s32 %v55, 128
    %v156 = vadd.s32 %v57, 128
    %157 = vset.pattern.permute.xlu0 2
    %158 = vperm.xlu0 %157, %v153
    %v159 = vpop.permute.xlu0 %158
    %160 = vset.pattern.permute.xlu0 2
    %161 = vperm.xlu0 %160, %v154
    %v162 = vpop.permute.xlu0 %161
    %163 = vset.pattern.permute.xlu0 2
    %164 = vperm.xlu0 %163, %v155
    %v165 = vpop.permute.xlu0 %164
    %166 = vset.pattern.permute.xlu0 2
    %167 = vperm.xlu0 %166, %v156
    %v168 = vpop.permute.xlu0 %167
    %vm169 = vcmp.eq.s32.totalorder %v59, %v159
    %vm170 = vcmp.eq.s32.totalorder %v60, %v159
    %vm171 = vcmp.eq.s32.totalorder %v59, %v162
    %vm172 = vcmp.eq.s32.totalorder %v60, %v162
    %vm173 = vcmp.eq.s32.totalorder %v59, %v165
    %vm174 = vcmp.eq.s32.totalorder %v60, %v165
    %vm175 = vcmp.eq.s32.totalorder %v59, %v168
    %vm176 = vcmp.eq.s32.totalorder %v60, %v168
    %v177 = vsel %vm169, 1, 0
    %v178 = vsel %vm170, 1, 0
    %v179 = vsel %vm171, 1, 0
    %v180 = vsel %vm172, 1, 0
    %v181 = vsel %vm173, 1, 0
    %v182 = vsel %vm174, 1, 0
    %v183 = vsel %vm175, 1, 0
    %v184 = vsel %vm176, 1, 0
    %v185 = vcvt.s32.f32 %v177
    %v186 = vcvt.s32.f32 %v178
    %v187 = vcvt.s32.f32 %v179
    %v188 = vcvt.s32.f32 %v180
    %v189 = vcvt.s32.f32 %v181
    %v190 = vcvt.s32.f32 %v182
    %v191 = vcvt.s32.f32 %v183
    %v192 = vcvt.s32.f32 %v184
    %v193 = vadd.f32 %v145, %v185
    %v194 = vadd.f32 %v146, %v186
    %v195 = vadd.f32 %v147, %v187
    %v196 = vadd.f32 %v148, %v188
    %v197 = vadd.f32 %v149, %v189
    %v198 = vadd.f32 %v150, %v190
    %v199 = vadd.f32 %v151, %v191
    %v200 = vadd.f32 %v152, %v192
    %v201 = vadd.s32 %v51, 192
    %v202 = vadd.s32 %v53, 192
    %v203 = vadd.s32 %v55, 192
    %v204 = vadd.s32 %v57, 192
    %205 = vset.pattern.permute.xlu0 3
    %206 = vperm.xlu0 %205, %v201
    %v207 = vpop.permute.xlu0 %206
    %208 = vset.pattern.permute.xlu0 3
    %209 = vperm.xlu0 %208, %v202
    %v210 = vpop.permute.xlu0 %209
    %211 = vset.pattern.permute.xlu0 3
    %212 = vperm.xlu0 %211, %v203
    %v213 = vpop.permute.xlu0 %212
    %214 = vset.pattern.permute.xlu0 3
    %215 = vperm.xlu0 %214, %v204
    %v216 = vpop.permute.xlu0 %215
    %vm217 = vcmp.eq.s32.totalorder %v59, %v207
    %vm218 = vcmp.eq.s32.totalorder %v60, %v207
    %vm219 = vcmp.eq.s32.totalorder %v59, %v210
    %vm220 = vcmp.eq.s32.totalorder %v60, %v210
    %vm221 = vcmp.eq.s32.totalorder %v59, %v213
    %vm222 = vcmp.eq.s32.totalorder %v60, %v213
    %vm223 = vcmp.eq.s32.totalorder %v59, %v216
    %vm224 = vcmp.eq.s32.totalorder %v60, %v216
    %v225 = vsel %vm217, 1, 0
    %v226 = vsel %vm218, 1, 0
    %v227 = vsel %vm219, 1, 0
    %v228 = vsel %vm220, 1, 0
    %v229 = vsel %vm221, 1, 0
    %v230 = vsel %vm222, 1, 0
    %v231 = vsel %vm223, 1, 0
    %v232 = vsel %vm224, 1, 0
    %v233 = vcvt.s32.f32 %v225
    %v234 = vcvt.s32.f32 %v226
    %v235 = vcvt.s32.f32 %v227
    %v236 = vcvt.s32.f32 %v228
    %v237 = vcvt.s32.f32 %v229
    %v238 = vcvt.s32.f32 %v230
    %v239 = vcvt.s32.f32 %v231
    %v240 = vcvt.s32.f32 %v232
    %v241 = vadd.f32 %v193, %v233
    %v242 = vadd.f32 %v194, %v234
    %v243 = vadd.f32 %v195, %v235
    %v244 = vadd.f32 %v196, %v236
    %v245 = vadd.f32 %v197, %v237
    %v246 = vadd.f32 %v198, %v238
    %v247 = vadd.f32 %v199, %v239
    %v248 = vadd.f32 %v200, %v240
    %v249 = vld [vmem:[#allocation2] sm:$0xff]
    %v250 = vld [vmem:[#allocation2 + $0x8] sm:$0xff]
    %v251 = vld [vmem:[#allocation2 + $0x10] sm:$0xff]
    %v252 = vld [vmem:[#allocation2 + $0x18] sm:$0xff]
    %v253 = vld [vmem:[#allocation2 + $0x20] sm:$0xff]
    %v254 = vld [vmem:[#allocation2 + $0x28] sm:$0xff]
    %v255 = vld [vmem:[#allocation2 + $0x30] sm:$0xff]
    %v256 = vld [vmem:[#allocation2 + $0x38] sm:$0xff]
    %v257 = vld [vmem:[#allocation2 + $0x40] sm:$0xff]
    %v258 = vld [vmem:[#allocation2 + $0x48] sm:$0xff]
    %v259 = vld [vmem:[#allocation2 + $0x50] sm:$0xff]
    %v260 = vld [vmem:[#allocation2 + $0x58] sm:$0xff]
    %v261 = vld [vmem:[#allocation2 + $0x60] sm:$0xff]
    %v262 = vld [vmem:[#allocation2 + $0x68] sm:$0xff]
    %v263 = vld [vmem:[#allocation2 + $0x70] sm:$0xff]
    %v264 = vld [vmem:[#allocation2 + $0x78] sm:$0xff]
    %v265 = vld [vmem:[#allocation2 + $0x80] sm:$0xff]
    %v266 = vld [vmem:[#allocation2 + $0x88] sm:$0xff]
    %v267 = vld [vmem:[#allocation2 + $0x90] sm:$0xff]
    %v268 = vld [vmem:[#allocation2 + $0x98] sm:$0xff]
    %v269 = vld [vmem:[#allocation2 + $0xa0] sm:$0xff]
    %v270 = vld [vmem:[#allocation2 + $0xa8] sm:$0xff]
    %v271 = vld [vmem:[#allocation2 + $0xb0] sm:$0xff]
    %v272 = vld [vmem:[#allocation2 + $0xb8] sm:$0xff]
    %v273 = vld [vmem:[#allocation2 + $0xc0] sm:$0xff]
    %v274 = vld [vmem:[#allocation2 + $0xc8] sm:$0xff]
    %v275 = vld [vmem:[#allocation2 + $0xd0] sm:$0xff]
    %v276 = vld [vmem:[#allocation2 + $0xd8] sm:$0xff]
    %v277 = vld [vmem:[#allocation2 + $0xe0] sm:$0xff]
    %v278 = vld [vmem:[#allocation2 + $0xe8] sm:$0xff]
    %v279 = vld [vmem:[#allocation2 + $0xf0] sm:$0xff]
    %v280 = vld [vmem:[#allocation2 + $0xf8] sm:$0xff]
    %281 = vmatprep.subr.mxu0 0.0
    %v282 = vand.u32 %v249, 4294901760
    %283 = vmatpush1.msra.mxu0 %v282
    %284 = vmatprep.subr.mxu0 0.0
    %v285 = vand.u32 %v250, 4294901760
    %286 = vmatpush1.msra.mxu0 %v285
    %287 = vmatprep.subr.mxu0 0.0
    %v288 = vand.u32 %v251, 4294901760
    %289 = vmatpush1.msra.mxu0 %v288
    %290 = vmatprep.subr.mxu0 0.0
    %v291 = vand.u32 %v252, 4294901760
    %292 = vmatpush1.msra.mxu0 %v291
    %293 = vmatprep.subr.mxu0 0.0
    %v294 = vand.u32 %v253, 4294901760
    %295 = vmatpush1.msra.mxu0 %v294
    %296 = vmatprep.subr.mxu0 0.0
    %v297 = vand.u32 %v254, 4294901760
    %298 = vmatpush1.msra.mxu0 %v297
    %299 = vmatprep.subr.mxu0 0.0
    %v300 = vand.u32 %v255, 4294901760
    %301 = vmatpush1.msra.mxu0 %v300
    %302 = vmatprep.subr.mxu0 0.0
    %v303 = vand.u32 %v256, 4294901760
    %304 = vmatpush1.msra.mxu0 %v303
    %305 = vmatprep.subr.mxu0 0.0
    %v306 = vand.u32 %v257, 4294901760
    %307 = vmatpush1.msra.mxu0 %v306
    %308 = vmatprep.subr.mxu0 0.0
    %v309 = vand.u32 %v258, 4294901760
    %310 = vmatpush1.msra.mxu0 %v309
    %311 = vmatprep.subr.mxu0 0.0
    %v312 = vand.u32 %v259, 4294901760
    %313 = vmatpush1.msra.mxu0 %v312
    %314 = vmatprep.subr.mxu0 0.0
    %v315 = vand.u32 %v260, 4294901760
    %316 = vmatpush1.msra.mxu0 %v315
    %317 = vmatprep.subr.mxu0 0.0
    %v318 = vand.u32 %v261, 4294901760
    %319 = vmatpush1.msra.mxu0 %v318
    %320 = vmatprep.subr.mxu0 0.0
    %v321 = vand.u32 %v262, 4294901760
    %322 = vmatpush1.msra.mxu0 %v321
    %323 = vmatprep.subr.mxu0 0.0
    %v324 = vand.u32 %v263, 4294901760
    %325 = vmatpush1.msra.mxu0 %v324
    %326 = vmatprep.subr.mxu0 0.0
    %v327 = vand.u32 %v264, 4294901760
    %328 = vmatpush1.msra.mxu0 %v327
    %329 = vmatprep.subr.mxu0 0.0
    %v330 = vand.u32 %v265, 4294901760
    %331 = vmatpush1.msra.mxu0 %v330
    %332 = vmatprep.subr.mxu0 0.0
    %v333 = vand.u32 %v266, 4294901760
    %334 = vmatpush1.msra.mxu0 %v333
    %335 = vmatprep.subr.mxu0 0.0
    %v336 = vand.u32 %v267, 4294901760
    %337 = vmatpush1.msra.mxu0 %v336
    %338 = vmatprep.subr.mxu0 0.0
    %v339 = vand.u32 %v268, 4294901760
    %340 = vmatpush1.msra.mxu0 %v339
    %341 = vmatprep.subr.mxu0 0.0
    %v342 = vand.u32 %v269, 4294901760
    %343 = vmatpush1.msra.mxu0 %v342
    %344 = vmatprep.subr.mxu0 0.0
    %v345 = vand.u32 %v270, 4294901760
    %346 = vmatpush1.msra.mxu0 %v345
    %347 = vmatprep.subr.mxu0 0.0
    %v348 = vand.u32 %v271, 4294901760
    %349 = vmatpush1.msra.mxu0 %v348
    %350 = vmatprep.subr.mxu0 0.0
    %v351 = vand.u32 %v272, 4294901760
    %352 = vmatpush1.msra.mxu0 %v351
    %353 = vmatprep.subr.mxu0 0.0
    %v354 = vand.u32 %v273, 4294901760
    %355 = vmatpush1.msra.mxu0 %v354
    %356 = vmatprep.subr.mxu0 0.0
    %v357 = vand.u32 %v274, 4294901760
    %358 = vmatpush1.msra.mxu0 %v357
    %359 = vmatprep.subr.mxu0 0.0
    %v360 = vand.u32 %v275, 4294901760
    %361 = vmatpush1.msra.mxu0 %v360
    %362 = vmatprep.subr.mxu0 0.0
    %v363 = vand.u32 %v276, 4294901760
    %364 = vmatpush1.msra.mxu0 %v363
    %365 = vmatprep.subr.mxu0 0.0
    %v366 = vand.u32 %v277, 4294901760
    %367 = vmatpush1.msra.mxu0 %v366
    %368 = vmatprep.subr.mxu0 0.0
    %v369 = vand.u32 %v278, 4294901760
    %370 = vmatpush1.msra.mxu0 %v369
    %371 = vmatprep.subr.mxu0 0.0
    %v372 = vand.u32 %v279, 4294901760
    %373 = vmatpush1.msra.mxu0 %v372
    %374 = vmatprep.subr.mxu0 0.0
    %v375 = vand.u32 %v280, 4294901760
    %376 = vmatpush1.msra.mxu0 %v375
    %v377 = vand.u32 %v242, 4294901760
    %v378 = vsub.f32 %v242, %v377
    %v379 = vand.u32 %v378, 4294901760
    %v380 = vsub.f32 %v378, %v379
    %v381 = vand.u32 %v380, 4294901760
    %382 = vmatprep.mubr.f32.mxu0 %v381
    %v383 = vand.u32 %v241, 4294901760
    %v384 = vsub.f32 %v241, %v383
    %v385 = vand.u32 %v384, 4294901760
    %v386 = vsub.f32 %v384, %v385
    %v387 = vand.u32 %v386, 4294901760
    %388 = vmatmul.mubr.f32.gmra.mrb[0].mxu0 %v387
    %v389 = vpop.f32.mrb[0].mxu0
    %v390 = vadd.f32 0.0, %v389
    %v391 = vpop.f32.mrb[0].mxu0
    %v392 = vand.u32 %v244, 4294901760
    %v393 = vsub.f32 %v244, %v392
    %v394 = vand.u32 %v393, 4294901760
    %v395 = vsub.f32 %v393, %v394
    %v396 = vand.u32 %v395, 4294901760
    %397 = vmatprep.mubr.f32.mxu0 %v396
    %v398 = vand.u32 %v243, 4294901760
    %v399 = vsub.f32 %v243, %v398
    %v400 = vand.u32 %v399, 4294901760
    %v401 = vsub.f32 %v399, %v400
    %v402 = vand.u32 %v401, 4294901760
    %403 = vmatmul.mubr.f32.gmra.mrb[0].mxu0 %v402
    %v404 = vpop.f32.mrb[0].mxu0
    %v405 = vadd.f32 0.0, %v404
    %v406 = vpop.f32.mrb[0].mxu0
    %v407 = vand.u32 %v246, 4294901760
    %v408 = vsub.f32 %v246, %v407
    %v409 = vand.u32 %v408, 4294901760
    %v410 = vsub.f32 %v408, %v409
    %v411 = vand.u32 %v410, 4294901760
    %412 = vmatprep.mubr.f32.mxu0 %v411
    %v413 = vand.u32 %v245, 4294901760
    %v414 = vsub.f32 %v245, %v413
    %v415 = vand.u32 %v414, 4294901760
    %v416 = vsub.f32 %v414, %v415
    %v417 = vand.u32 %v416, 4294901760
    %418 = vmatmul.mubr.f32.gmra.mrb[0].mxu0 %v417
    %v419 = vpop.f32.mrb[0].mxu0
    %v420 = vadd.f32 0.0, %v419
    %v421 = vpop.f32.mrb[0].mxu0
    %v422 = vand.u32 %v248, 4294901760
    %v423 = vsub.f32 %v248, %v422
    %v424 = vand.u32 %v423, 4294901760
    %v425 = vsub.f32 %v423, %v424
    %v426 = vand.u32 %v425, 4294901760
    %427 = vmatprep.mubr.f32.mxu0 %v426
    %v428 = vand.u32 %v247, 4294901760
    %v429 = vsub.f32 %v247, %v428
    %v430 = vand.u32 %v429, 4294901760
    %v431 = vsub.f32 %v429, %v430
    %v432 = vand.u32 %v431, 4294901760
    %433 = vmatmul.mubr.f32.gmra.mrb[0].mxu0 %v432
    %v434 = vpop.f32.mrb[0].mxu0
    %v435 = vadd.f32 0.0, %v434
    %v436 = vpop.f32.mrb[0].mxu0
    %437 = vdwg.mxu0
    %438 = vmatprep.subr.mxu0 0.0
    %v439 = vand.u32 %v249, 4294901760
    %v440 = vsub.f32 %v249, %v439
    %v441 = vand.u32 %v440, 4294901760
    %v442 = vsub.f32 %v440, %v441
    %v443 = vand.u32 %v442, 4294901760
    %444 = vmatpush1.msra.mxu0 %v443
    %445 = vmatprep.subr.mxu0 0.0
    %v446 = vand.u32 %v250, 4294901760
    %v447 = vsub.f32 %v250, %v446
    %v448 = vand.u32 %v447, 4294901760
    %v449 = vsub.f32 %v447, %v448
    %v450 = vand.u32 %v449, 4294901760
    %451 = vmatpush1.msra.mxu0 %v450
    %452 = vmatprep.subr.mxu0 0.0
    %v453 = vand.u32 %v251, 4294901760
    %v454 = vsub.f32 %v251, %v453
    %v455 = vand.u32 %v454, 4294901760
    %v456 = vsub.f32 %v454, %v455
    %v457 = vand.u32 %v456, 4294901760
    %458 = vmatpush1.msra.mxu0 %v457
    %459 = vmatprep.subr.mxu0 0.0
    %v460 = vand.u32 %v252, 4294901760
    %v461 = vsub.f32 %v252, %v460
    %v462 = vand.u32 %v461, 4294901760
    %v463 = vsub.f32 %v461, %v462
    %v464 = vand.u32 %v463, 4294901760
    %465 = vmatpush1.msra.mxu0 %v464
    %466 = vmatprep.subr.mxu0 0.0
    %v467 = vand.u32 %v253, 4294901760
    %v468 = vsub.f32 %v253, %v467
    %v469 = vand.u32 %v468, 4294901760
    %v470 = vsub.f32 %v468, %v469
    %v471 = vand.u32 %v470, 4294901760
    %472 = vmatpush1.msra.mxu0 %v471
    %473 = vmatprep.subr.mxu0 0.0
    %v474 = vand.u32 %v254, 4294901760
    %v475 = vsub.f32 %v254, %v474
    %v476 = vand.u32 %v475, 4294901760
    %v477 = vsub.f32 %v475, %v476
    %v478 = vand.u32 %v477, 4294901760
    %479 = vmatpush1.msra.mxu0 %v478
    %480 = vmatprep.subr.mxu0 0.0
    %v481 = vand.u32 %v255, 4294901760
    %v482 = vsub.f32 %v255, %v481
    %v483 = vand.u32 %v482, 4294901760
    %v484 = vsub.f32 %v482, %v483
    %v485 = vand.u32 %v484, 4294901760
    %486 = vmatpush1.msra.mxu0 %v485
    %487 = vmatprep.subr.mxu0 0.0
    %v488 = vand.u32 %v256, 4294901760
    %v489 = vsub.f32 %v256, %v488
    %v490 = vand.u32 %v489, 4294901760
    %v491 = vsub.f32 %v489, %v490
    %v492 = vand.u32 %v491, 4294901760
    %493 = vmatpush1.msra.mxu0 %v492
    %494 = vmatprep.subr.mxu0 0.0
    %v495 = vand.u32 %v257, 4294901760
    %v496 = vsub.f32 %v257, %v495
    %v497 = vand.u32 %v496, 4294901760
    %v498 = vsub.f32 %v496, %v497
    %v499 = vand.u32 %v498, 4294901760
    %500 = vmatpush1.msra.mxu0 %v499
    %501 = vmatprep.subr.mxu0 0.0
    %v502 = vand.u32 %v258, 4294901760
    %v503 = vsub.f32 %v258, %v502
    %v504 = vand.u32 %v503, 4294901760
    %v505 = vsub.f32 %v503, %v504
    %v506 = vand.u32 %v505, 4294901760
    %507 = vmatpush1.msra.mxu0 %v506
    %508 = vmatprep.subr.mxu0 0.0
    %v509 = vand.u32 %v259, 4294901760
    %v510 = vsub.f32 %v259, %v509
    %v511 = vand.u32 %v510, 4294901760
    %v512 = vsub.f32 %v510, %v511
    %v513 = vand.u32 %v512, 4294901760
    %514 = vmatpush1.msra.mxu0 %v513
    %515 = vmatprep.subr.mxu0 0.0
    %v516 = vand.u32 %v260, 4294901760
    %v517 = vsub.f32 %v260, %v516
    %v518 = vand.u32 %v517, 4294901760
    %v519 = vsub.f32 %v517, %v518
    %v520 = vand.u32 %v519, 4294901760
    %521 = vmatpush1.msra.mxu0 %v520
    %522 = vmatprep.subr.mxu0 0.0
    %v523 = vand.u32 %v261, 4294901760
    %v524 = vsub.f32 %v261, %v523
    %v525 = vand.u32 %v524, 4294901760
    %v526 = vsub.f32 %v524, %v525
    %v527 = vand.u32 %v526, 4294901760
    %528 = vmatpush1.msra.mxu0 %v527
    %529 = vmatprep.subr.mxu0 0.0
    %v530 = vand.u32 %v262, 4294901760
    %v531 = vsub.f32 %v262, %v530
    %v532 = vand.u32 %v531, 4294901760
    %v533 = vsub.f32 %v531, %v532
    %v534 = vand.u32 %v533, 4294901760
    %535 = vmatpush1.msra.mxu0 %v534
    %536 = vmatprep.subr.mxu0 0.0
    %v537 = vand.u32 %v263, 4294901760
    %v538 = vsub.f32 %v263, %v537
    %v539 = vand.u32 %v538, 4294901760
    %v540 = vsub.f32 %v538, %v539
    %v541 = vand.u32 %v540, 4294901760
    %542 = vmatpush1.msra.mxu0 %v541
    %543 = vmatprep.subr.mxu0 0.0
    %v544 = vand.u32 %v264, 4294901760
    %v545 = vsub.f32 %v264, %v544
    %v546 = vand.u32 %v545, 4294901760
    %v547 = vsub.f32 %v545, %v546
    %v548 = vand.u32 %v547, 4294901760
    %549 = vmatpush1.msra.mxu0 %v548
    %550 = vmatprep.subr.mxu0 0.0
    %v551 = vand.u32 %v265, 4294901760
    %v552 = vsub.f32 %v265, %v551
    %v553 = vand.u32 %v552, 4294901760
    %v554 = vsub.f32 %v552, %v553
    %v555 = vand.u32 %v554, 4294901760
    %556 = vmatpush1.msra.mxu0 %v555
    %557 = vmatprep.subr.mxu0 0.0
    %v558 = vand.u32 %v266, 4294901760
    %v559 = vsub.f32 %v266, %v558
    %v560 = vand.u32 %v559, 4294901760
    %v561 = vsub.f32 %v559, %v560
    %v562 = vand.u32 %v561, 4294901760
    %563 = vmatpush1.msra.mxu0 %v562
    %564 = vmatprep.subr.mxu0 0.0
    %v565 = vand.u32 %v267, 4294901760
    %v566 = vsub.f32 %v267, %v565
    %v567 = vand.u32 %v566, 4294901760
    %v568 = vsub.f32 %v566, %v567
    %v569 = vand.u32 %v568, 4294901760
    %570 = vmatpush1.msra.mxu0 %v569
    %571 = vmatprep.subr.mxu0 0.0
    %v572 = vand.u32 %v268, 4294901760
    %v573 = vsub.f32 %v268, %v572
    %v574 = vand.u32 %v573, 4294901760
    %v575 = vsub.f32 %v573, %v574
    %v576 = vand.u32 %v575, 4294901760
    %577 = vmatpush1.msra.mxu0 %v576
    %578 = vmatprep.subr.mxu0 0.0
    %v579 = vand.u32 %v269, 4294901760
    %v580 = vsub.f32 %v269, %v579
    %v581 = vand.u32 %v580, 4294901760
    %v582 = vsub.f32 %v580, %v581
    %v583 = vand.u32 %v582, 4294901760
    %584 = vmatpush1.msra.mxu0 %v583
    %585 = vmatprep.subr.mxu0 0.0
    %v586 = vand.u32 %v270, 4294901760
    %v587 = vsub.f32 %v270, %v586
    %v588 = vand.u32 %v587, 4294901760
    %v589 = vsub.f32 %v587, %v588
    %v590 = vand.u32 %v589, 4294901760
    %591 = vmatpush1.msra.mxu0 %v590
    %592 = vmatprep.subr.mxu0 0.0
    %v593 = vand.u32 %v271, 4294901760
    %v594 = vsub.f32 %v271, %v593
    %v595 = vand.u32 %v594, 4294901760
    %v596 = vsub.f32 %v594, %v595
    %v597 = vand.u32 %v596, 4294901760
    %598 = vmatpush1.msra.mxu0 %v597
    %599 = vmatprep.subr.mxu0 0.0
    %v600 = vand.u32 %v272, 4294901760
    %v601 = vsub.f32 %v272, %v600
    %v602 = vand.u32 %v601, 4294901760
    %v603 = vsub.f32 %v601, %v602
    %v604 = vand.u32 %v603, 4294901760
    %605 = vmatpush1.msra.mxu0 %v604
    %606 = vmatprep.subr.mxu0 0.0
    %v607 = vand.u32 %v273, 4294901760
    %v608 = vsub.f32 %v273, %v607
    %v609 = vand.u32 %v608, 4294901760
    %v610 = vsub.f32 %v608, %v609
    %v611 = vand.u32 %v610, 4294901760
    %612 = vmatpush1.msra.mxu0 %v611
    %613 = vmatprep.subr.mxu0 0.0
    %v614 = vand.u32 %v274, 4294901760
    %v615 = vsub.f32 %v274, %v614
    %v616 = vand.u32 %v615, 4294901760
    %v617 = vsub.f32 %v615, %v616
    %v618 = vand.u32 %v617, 4294901760
    %619 = vmatpush1.msra.mxu0 %v618
    %620 = vmatprep.subr.mxu0 0.0
    %v621 = vand.u32 %v275, 4294901760
    %v622 = vsub.f32 %v275, %v621
    %v623 = vand.u32 %v622, 4294901760
    %v624 = vsub.f32 %v622, %v623
    %v625 = vand.u32 %v624, 4294901760
    %626 = vmatpush1.msra.mxu0 %v625
    %627 = vmatprep.subr.mxu0 0.0
    %v628 = vand.u32 %v276, 4294901760
    %v629 = vsub.f32 %v276, %v628
    %v630 = vand.u32 %v629, 4294901760
    %v631 = vsub.f32 %v629, %v630
    %v632 = vand.u32 %v631, 4294901760
    %633 = vmatpush1.msra.mxu0 %v632
    %634 = vmatprep.subr.mxu0 0.0
    %v635 = vand.u32 %v277, 4294901760
    %v636 = vsub.f32 %v277, %v635
    %v637 = vand.u32 %v636, 4294901760
    %v638 = vsub.f32 %v636, %v637
    %v639 = vand.u32 %v638, 4294901760
    %640 = vmatpush1.msra.mxu0 %v639
    %641 = vmatprep.subr.mxu0 0.0
    %v642 = vand.u32 %v278, 4294901760
    %v643 = vsub.f32 %v278, %v642
    %v644 = vand.u32 %v643, 4294901760
    %v645 = vsub.f32 %v643, %v644
    %v646 = vand.u32 %v645, 4294901760
    %647 = vmatpush1.msra.mxu0 %v646
    %648 = vmatprep.subr.mxu0 0.0
    %v649 = vand.u32 %v279, 4294901760
    %v650 = vsub.f32 %v279, %v649
    %v651 = vand.u32 %v650, 4294901760
    %v652 = vsub.f32 %v650, %v651
    %v653 = vand.u32 %v652, 4294901760
    %654 = vmatpush1.msra.mxu0 %v653
    %655 = vmatprep.subr.mxu0 0.0
    %v656 = vand.u32 %v280, 4294901760
    %v657 = vsub.f32 %v280, %v656
    %v658 = vand.u32 %v657, 4294901760
    %v659 = vsub.f32 %v657, %v658
    %v660 = vand.u32 %v659, 4294901760
    %661 = vmatpush1.msra.mxu0 %v660
    %v662 = vand.u32 %v242, 4294901760
    %663 = vmatprep.mubr.f32.mxu0 %v662
    %v664 = vand.u32 %v241, 4294901760
    %665 = vmatmul.mubr.f32.gmra.mrb[0].mxu0 %v664
    %v666 = vpop.f32.mrb[0].mxu0
    %v667 = vadd.f32 %v390, %v666
    %v668 = vpop.f32.mrb[0].mxu0
    %v669 = vand.u32 %v244, 4294901760
    %670 = vmatprep.mubr.f32.mxu0 %v669
    %v671 = vand.u32 %v243, 4294901760
    %672 = vmatmul.mubr.f32.gmra.mrb[0].mxu0 %v671
    %v673 = vpop.f32.mrb[0].mxu0
    %v674 = vadd.f32 %v405, %v673
    %v675 = vpop.f32.mrb[0].mxu0
    %v676 = vand.u32 %v246, 4294901760
    %677 = vmatprep.mubr.f32.mxu0 %v676
    %v678 = vand.u32 %v245, 4294901760
    %679 = vmatmul.mubr.f32.gmra.mrb[0].mxu0 %v678
    %v680 = vpop.f32.mrb[0].mxu0
    %v681 = vadd.f32 %v420, %v680
    %v682 = vpop.f32.mrb[0].mxu0
    %v683 = vand.u32 %v248, 4294901760
    %684 = vmatprep.mubr.f32.mxu0 %v683
    %v685 = vand.u32 %v247, 4294901760
    %686 = vmatmul.mubr.f32.gmra.mrb[0].mxu0 %v685
    %v687 = vpop.f32.mrb[0].mxu0
    %v688 = vadd.f32 %v435, %v687
    %v689 = vpop.f32.mrb[0].mxu0
    %690 = vdwg.mxu0
    %691 = vmatprep.subr.mxu0 0.0
    %v692 = vand.u32 %v249, 4294901760
    %v693 = vsub.f32 %v249, %v692
    %694 = vmatpush1.msra.mxu0 %v693
    %695 = vmatprep.subr.mxu0 0.0
    %v696 = vand.u32 %v250, 4294901760
    %v697 = vsub.f32 %v250, %v696
    %698 = vmatpush1.msra.mxu0 %v697
    %699 = vmatprep.subr.mxu0 0.0
    %v700 = vand.u32 %v251, 4294901760
    %v701 = vsub.f32 %v251, %v700
    %702 = vmatpush1.msra.mxu0 %v701
    %703 = vmatprep.subr.mxu0 0.0
    %v704 = vand.u32 %v252, 4294901760
    %v705 = vsub.f32 %v252, %v704
    %706 = vmatpush1.msra.mxu0 %v705
    %707 = vmatprep.subr.mxu0 0.0
    %v708 = vand.u32 %v253, 4294901760
    %v709 = vsub.f32 %v253, %v708
    %710 = vmatpush1.msra.mxu0 %v709
    %711 = vmatprep.subr.mxu0 0.0
    %v712 = vand.u32 %v254, 4294901760
    %v713 = vsub.f32 %v254, %v712
    %714 = vmatpush1.msra.mxu0 %v713
    %715 = vmatprep.subr.mxu0 0.0
    %v716 = vand.u32 %v255, 4294901760
    %v717 = vsub.f32 %v255, %v716
    %718 = vmatpush1.msra.mxu0 %v717
    %719 = vmatprep.subr.mxu0 0.0
    %v720 = vand.u32 %v256, 4294901760
    %v721 = vsub.f32 %v256, %v720
    %722 = vmatpush1.msra.mxu0 %v721
    %723 = vmatprep.subr.mxu0 0.0
    %v724 = vand.u32 %v257, 4294901760
    %v725 = vsub.f32 %v257, %v724
    %726 = vmatpush1.msra.mxu0 %v725
    %727 = vmatprep.subr.mxu0 0.0
    %v728 = vand.u32 %v258, 4294901760
    %v729 = vsub.f32 %v258, %v728
    %730 = vmatpush1.msra.mxu0 %v729
    %731 = vmatprep.subr.mxu0 0.0
    %v732 = vand.u32 %v259, 4294901760
    %v733 = vsub.f32 %v259, %v732
    %734 = vmatpush1.msra.mxu0 %v733
    %735 = vmatprep.subr.mxu0 0.0
    %v736 = vand.u32 %v260, 4294901760
    %v737 = vsub.f32 %v260, %v736
    %738 = vmatpush1.msra.mxu0 %v737
    %739 = vmatprep.subr.mxu0 0.0
    %v740 = vand.u32 %v261, 4294901760
    %v741 = vsub.f32 %v261, %v740
    %742 = vmatpush1.msra.mxu0 %v741
    %743 = vmatprep.subr.mxu0 0.0
    %v744 = vand.u32 %v262, 4294901760
    %v745 = vsub.f32 %v262, %v744
    %746 = vmatpush1.msra.mxu0 %v745
    %747 = vmatprep.subr.mxu0 0.0
    %v748 = vand.u32 %v263, 4294901760
    %v749 = vsub.f32 %v263, %v748
    %750 = vmatpush1.msra.mxu0 %v749
    %751 = vmatprep.subr.mxu0 0.0
    %v752 = vand.u32 %v264, 4294901760
    %v753 = vsub.f32 %v264, %v752
    %754 = vmatpush1.msra.mxu0 %v753
    %755 = vmatprep.subr.mxu0 0.0
    %v756 = vand.u32 %v265, 4294901760
    %v757 = vsub.f32 %v265, %v756
    %758 = vmatpush1.msra.mxu0 %v757
    %759 = vmatprep.subr.mxu0 0.0
    %v760 = vand.u32 %v266, 4294901760
    %v761 = vsub.f32 %v266, %v760
    %762 = vmatpush1.msra.mxu0 %v761
    %763 = vmatprep.subr.mxu0 0.0
    %v764 = vand.u32 %v267, 4294901760
    %v765 = vsub.f32 %v267, %v764
    %766 = vmatpush1.msra.mxu0 %v765
    %767 = vmatprep.subr.mxu0 0.0
    %v768 = vand.u32 %v268, 4294901760
    %v769 = vsub.f32 %v268, %v768
    %770 = vmatpush1.msra.mxu0 %v769
    %771 = vmatprep.subr.mxu0 0.0
    %v772 = vand.u32 %v269, 4294901760
    %v773 = vsub.f32 %v269, %v772
    %774 = vmatpush1.msra.mxu0 %v773
    %775 = vmatprep.subr.mxu0 0.0
    %v776 = vand.u32 %v270, 4294901760
    %v777 = vsub.f32 %v270, %v776
    %778 = vmatpush1.msra.mxu0 %v777
    %779 = vmatprep.subr.mxu0 0.0
    %v780 = vand.u32 %v271, 4294901760
    %v781 = vsub.f32 %v271, %v780
    %782 = vmatpush1.msra.mxu0 %v781
    %783 = vmatprep.subr.mxu0 0.0
    %v784 = vand.u32 %v272, 4294901760
    %v785 = vsub.f32 %v272, %v784
    %786 = vmatpush1.msra.mxu0 %v785
    %787 = vmatprep.subr.mxu0 0.0
    %v788 = vand.u32 %v273, 4294901760
    %v789 = vsub.f32 %v273, %v788
    %790 = vmatpush1.msra.mxu0 %v789
    %791 = vmatprep.subr.mxu0 0.0
    %v792 = vand.u32 %v274, 4294901760
    %v793 = vsub.f32 %v274, %v792
    %794 = vmatpush1.msra.mxu0 %v793
    %795 = vmatprep.subr.mxu0 0.0
    %v796 = vand.u32 %v275, 4294901760
    %v797 = vsub.f32 %v275, %v796
    %798 = vmatpush1.msra.mxu0 %v797
    %799 = vmatprep.subr.mxu0 0.0
    %v800 = vand.u32 %v276, 4294901760
    %v801 = vsub.f32 %v276, %v800
    %802 = vmatpush1.msra.mxu0 %v801
    %803 = vmatprep.subr.mxu0 0.0
    %v804 = vand.u32 %v277, 4294901760
    %v805 = vsub.f32 %v277, %v804
    %806 = vmatpush1.msra.mxu0 %v805
    %807 = vmatprep.subr.mxu0 0.0
    %v808 = vand.u32 %v278, 4294901760
    %v809 = vsub.f32 %v278, %v808
    %810 = vmatpush1.msra.mxu0 %v809
    %811 = vmatprep.subr.mxu0 0.0
    %v812 = vand.u32 %v279, 4294901760
    %v813 = vsub.f32 %v279, %v812
    %814 = vmatpush1.msra.mxu0 %v813
    %815 = vmatprep.subr.mxu0 0.0
    %v816 = vand.u32 %v280, 4294901760
    %v817 = vsub.f32 %v280, %v816
    %818 = vmatpush1.msra.mxu0 %v817
    %v819 = vand.u32 %v242, 4294901760
    %v820 = vsub.f32 %v242, %v819
    %821 = vmatprep.mubr.f32.mxu0 %v820
    %v822 = vand.u32 %v241, 4294901760
    %v823 = vsub.f32 %v241, %v822
    %824 = vmatmul.mubr.f32.gmra.mrb[0].mxu0 %v823
    %v825 = vpop.f32.mrb[0].mxu0
    %v826 = vadd.f32 %v667, %v825
    %v827 = vpop.f32.mrb[0].mxu0
    %v828 = vand.u32 %v244, 4294901760
    %v829 = vsub.f32 %v244, %v828
    %830 = vmatprep.mubr.f32.mxu0 %v829
    %v831 = vand.u32 %v243, 4294901760
    %v832 = vsub.f32 %v243, %v831
    %833 = vmatmul.mubr.f32.gmra.mrb[0].mxu0 %v832
    %v834 = vpop.f32.mrb[0].mxu0
    %v835 = vadd.f32 %v674, %v834
    %v836 = vpop.f32.mrb[0].mxu0
    %v837 = vand.u32 %v246, 4294901760
    %v838 = vsub.f32 %v246, %v837
    %839 = vmatprep.mubr.f32.mxu0 %v838
    %v840 = vand.u32 %v245, 4294901760
    %v841 = vsub.f32 %v245, %v840
    %842 = vmatmul.mubr.f32.gmra.mrb[0].mxu0 %v841
    %v843 = vpop.f32.mrb[0].mxu0
    %v844 = vadd.f32 %v681, %v843
    %v845 = vpop.f32.mrb[0].mxu0
    %v846 = vand.u32 %v248, 4294901760
    %v847 = vsub.f32 %v248, %v846
    %848 = vmatprep.mubr.f32.mxu0 %v847
    %v849 = vand.u32 %v247, 4294901760
    %v850 = vsub.f32 %v247, %v849
    %851 = vmatmul.mubr.f32.gmra.mrb[0].mxu0 %v850
    %v852 = vpop.f32.mrb[0].mxu0
    %v853 = vadd.f32 %v688, %v852
    %v854 = vpop.f32.mrb[0].mxu0
    %855 = vdwg.mxu0
    %856 = vmatprep.subr.mxu0 0.0
    %v857 = vand.u32 %v249, 4294901760
    %858 = vmatpush1.msra.mxu0 %v857
    %859 = vmatprep.subr.mxu0 0.0
    %v860 = vand.u32 %v250, 4294901760
    %861 = vmatpush1.msra.mxu0 %v860
    %862 = vmatprep.subr.mxu0 0.0
    %v863 = vand.u32 %v251, 4294901760
    %864 = vmatpush1.msra.mxu0 %v863
    %865 = vmatprep.subr.mxu0 0.0
    %v866 = vand.u32 %v252, 4294901760
    %867 = vmatpush1.msra.mxu0 %v866
    %868 = vmatprep.subr.mxu0 0.0
    %v869 = vand.u32 %v253, 4294901760
    %870 = vmatpush1.msra.mxu0 %v869
    %871 = vmatprep.subr.mxu0 0.0
    %v872 = vand.u32 %v254, 4294901760
    %873 = vmatpush1.msra.mxu0 %v872
    %874 = vmatprep.subr.mxu0 0.0
    %v875 = vand.u32 %v255, 4294901760
    %876 = vmatpush1.msra.mxu0 %v875
    %877 = vmatprep.subr.mxu0 0.0
    %v878 = vand.u32 %v256, 4294901760
    %879 = vmatpush1.msra.mxu0 %v878
    %880 = vmatprep.subr.mxu0 0.0
    %v881 = vand.u32 %v257, 4294901760
    %882 = vmatpush1.msra.mxu0 %v881
    %883 = vmatprep.subr.mxu0 0.0
    %v884 = vand.u32 %v258, 4294901760
    %885 = vmatpush1.msra.mxu0 %v884
    %886 = vmatprep.subr.mxu0 0.0
    %v887 = vand.u32 %v259, 4294901760
    %888 = vmatpush1.msra.mxu0 %v887
    %889 = vmatprep.subr.mxu0 0.0
    %v890 = vand.u32 %v260, 4294901760
    %891 = vmatpush1.msra.mxu0 %v890
    %892 = vmatprep.subr.mxu0 0.0
    %v893 = vand.u32 %v261, 4294901760
    %894 = vmatpush1.msra.mxu0 %v893
    %895 = vmatprep.subr.mxu0 0.0
    %v896 = vand.u32 %v262, 4294901760
    %897 = vmatpush1.msra.mxu0 %v896
    %898 = vmatprep.subr.mxu0 0.0
    %v899 = vand.u32 %v263, 4294901760
    %900 = vmatpush1.msra.mxu0 %v899
    %901 = vmatprep.subr.mxu0 0.0
    %v902 = vand.u32 %v264, 4294901760
    %903 = vmatpush1.msra.mxu0 %v902
    %904 = vmatprep.subr.mxu0 0.0
    %v905 = vand.u32 %v265, 4294901760
    %906 = vmatpush1.msra.mxu0 %v905
    %907 = vmatprep.subr.mxu0 0.0
    %v908 = vand.u32 %v266, 4294901760
    %909 = vmatpush1.msra.mxu0 %v908
    %910 = vmatprep.subr.mxu0 0.0
    %v911 = vand.u32 %v267, 4294901760
    %912 = vmatpush1.msra.mxu0 %v911
    %913 = vmatprep.subr.mxu0 0.0
    %v914 = vand.u32 %v268, 4294901760
    %915 = vmatpush1.msra.mxu0 %v914
    %916 = vmatprep.subr.mxu0 0.0
    %v917 = vand.u32 %v269, 4294901760
    %918 = vmatpush1.msra.mxu0 %v917
    %919 = vmatprep.subr.mxu0 0.0
    %v920 = vand.u32 %v270, 4294901760
    %921 = vmatpush1.msra.mxu0 %v920
    %922 = vmatprep.subr.mxu0 0.0
    %v923 = vand.u32 %v271, 4294901760
    %924 = vmatpush1.msra.mxu0 %v923
    %925 = vmatprep.subr.mxu0 0.0
    %v926 = vand.u32 %v272, 4294901760
    %927 = vmatpush1.msra.mxu0 %v926
    %928 = vmatprep.subr.mxu0 0.0
    %v929 = vand.u32 %v273, 4294901760
    %930 = vmatpush1.msra.mxu0 %v929
    %931 = vmatprep.subr.mxu0 0.0
    %v932 = vand.u32 %v274, 4294901760
    %933 = vmatpush1.msra.mxu0 %v932
    %934 = vmatprep.subr.mxu0 0.0
    %v935 = vand.u32 %v275, 4294901760
    %936 = vmatpush1.msra.mxu0 %v935
    %937 = vmatprep.subr.mxu0 0.0
    %v938 = vand.u32 %v276, 4294901760
    %939 = vmatpush1.msra.mxu0 %v938
    %940 = vmatprep.subr.mxu0 0.0
    %v941 = vand.u32 %v277, 4294901760
    %942 = vmatpush1.msra.mxu0 %v941
    %943 = vmatprep.subr.mxu0 0.0
    %v944 = vand.u32 %v278, 4294901760
    %945 = vmatpush1.msra.mxu0 %v944
    %946 = vmatprep.subr.mxu0 0.0
    %v947 = vand.u32 %v279, 4294901760
    %948 = vmatpush1.msra.mxu0 %v947
    %949 = vmatprep.subr.mxu0 0.0
    %v950 = vand.u32 %v280, 4294901760
    %951 = vmatpush1.msra.mxu0 %v950
    %v952 = vand.u32 %v242, 4294901760
    %v953 = vsub.f32 %v242, %v952
    %v954 = vand.u32 %v953, 4294901760
    %955 = vmatprep.mubr.f32.mxu0 %v954
    %v956 = vand.u32 %v241, 4294901760
    %v957 = vsub.f32 %v241, %v956
    %v958 = vand.u32 %v957, 4294901760
    %959 = vmatmul.mubr.f32.gmra.mrb[0].mxu0 %v958
    %v960 = vpop.f32.mrb[0].mxu0
    %v961 = vadd.f32 %v826, %v960
    %v962 = vpop.f32.mrb[0].mxu0
    %v963 = vand.u32 %v244, 4294901760
    %v964 = vsub.f32 %v244, %v963
    %v965 = vand.u32 %v964, 4294901760
    %966 = vmatprep.mubr.f32.mxu0 %v965
    %v967 = vand.u32 %v243, 4294901760
    %v968 = vsub.f32 %v243, %v967
    %v969 = vand.u32 %v968, 4294901760
    %970 = vmatmul.mubr.f32.gmra.mrb[0].mxu0 %v969
    %v971 = vpop.f32.mrb[0].mxu0
    %v972 = vadd.f32 %v835, %v971
    %v973 = vpop.f32.mrb[0].mxu0
    %v974 = vand.u32 %v246, 4294901760
    %v975 = vsub.f32 %v246, %v974
    %v976 = vand.u32 %v975, 4294901760
    %977 = vmatprep.mubr.f32.mxu0 %v976
    %v978 = vand.u32 %v245, 4294901760
    %v979 = vsub.f32 %v245, %v978
    %v980 = vand.u32 %v979, 4294901760
    %981 = vmatmul.mubr.f32.gmra.mrb[0].mxu0 %v980
    %v982 = vpop.f32.mrb[0].mxu0
    %v983 = vadd.f32 %v844, %v982
    %v984 = vpop.f32.mrb[0].mxu0
    %v985 = vand.u32 %v248, 4294901760
    %v986 = vsub.f32 %v248, %v985
    %v987 = vand.u32 %v986, 4294901760
    %988 = vmatprep.mubr.f32.mxu0 %v987
    %v989 = vand.u32 %v247, 4294901760
    %v990 = vsub.f32 %v247, %v989
    %v991 = vand.u32 %v990, 4294901760
    %992 = vmatmul.mubr.f32.gmra.mrb[0].mxu0 %v991
    %v993 = vpop.f32.mrb[0].mxu0
    %v994 = vadd.f32 %v853, %v993
    %v995 = vpop.f32.mrb[0].mxu0
    %996 = vdwg.mxu0
    %997 = vmatprep.subr.mxu0 0.0
    %v998 = vand.u32 %v249, 4294901760
    %v999 = vsub.f32 %v249, %v998
    %v1000 = vand.u32 %v999, 4294901760
    %1001 = vmatpush1.msra.mxu0 %v1000
    %1002 = vmatprep.subr.mxu0 0.0
    %v1003 = vand.u32 %v250, 4294901760
    %v1004 = vsub.f32 %v250, %v1003
    %v1005 = vand.u32 %v1004, 4294901760
    %1006 = vmatpush1.msra.mxu0 %v1005
    %1007 = vmatprep.subr.mxu0 0.0
    %v1008 = vand.u32 %v251, 4294901760
    %v1009 = vsub.f32 %v251, %v1008
    %v1010 = vand.u32 %v1009, 4294901760
    %1011 = vmatpush1.msra.mxu0 %v1010
    %1012 = vmatprep.subr.mxu0 0.0
    %v1013 = vand.u32 %v252, 4294901760
    %v1014 = vsub.f32 %v252, %v1013
    %v1015 = vand.u32 %v1014, 4294901760
    %1016 = vmatpush1.msra.mxu0 %v1015
    %1017 = vmatprep.subr.mxu0 0.0
    %v1018 = vand.u32 %v253, 4294901760
    %v1019 = vsub.f32 %v253, %v1018
    %v1020 = vand.u32 %v1019, 4294901760
    %1021 = vmatpush1.msra.mxu0 %v1020
    %1022 = vmatprep.subr.mxu0 0.0
    %v1023 = vand.u32 %v254, 4294901760
    %v1024 = vsub.f32 %v254, %v1023
    %v1025 = vand.u32 %v1024, 4294901760
    %1026 = vmatpush1.msra.mxu0 %v1025
    %1027 = vmatprep.subr.mxu0 0.0
    %v1028 = vand.u32 %v255, 4294901760
    %v1029 = vsub.f32 %v255, %v1028
    %v1030 = vand.u32 %v1029, 4294901760
    %1031 = vmatpush1.msra.mxu0 %v1030
    %1032 = vmatprep.subr.mxu0 0.0
    %v1033 = vand.u32 %v256, 4294901760
    %v1034 = vsub.f32 %v256, %v1033
    %v1035 = vand.u32 %v1034, 4294901760
    %1036 = vmatpush1.msra.mxu0 %v1035
    %1037 = vmatprep.subr.mxu0 0.0
    %v1038 = vand.u32 %v257, 4294901760
    %v1039 = vsub.f32 %v257, %v1038
    %v1040 = vand.u32 %v1039, 4294901760
    %1041 = vmatpush1.msra.mxu0 %v1040
    %1042 = vmatprep.subr.mxu0 0.0
    %v1043 = vand.u32 %v258, 4294901760
    %v1044 = vsub.f32 %v258, %v1043
    %v1045 = vand.u32 %v1044, 4294901760
    %1046 = vmatpush1.msra.mxu0 %v1045
    %1047 = vmatprep.subr.mxu0 0.0
    %v1048 = vand.u32 %v259, 4294901760
    %v1049 = vsub.f32 %v259, %v1048
    %v1050 = vand.u32 %v1049, 4294901760
    %1051 = vmatpush1.msra.mxu0 %v1050
    %1052 = vmatprep.subr.mxu0 0.0
    %v1053 = vand.u32 %v260, 4294901760
    %v1054 = vsub.f32 %v260, %v1053
    %v1055 = vand.u32 %v1054, 4294901760
    %1056 = vmatpush1.msra.mxu0 %v1055
    %1057 = vmatprep.subr.mxu0 0.0
    %v1058 = vand.u32 %v261, 4294901760
    %v1059 = vsub.f32 %v261, %v1058
    %v1060 = vand.u32 %v1059, 4294901760
    %1061 = vmatpush1.msra.mxu0 %v1060
    %1062 = vmatprep.subr.mxu0 0.0
    %v1063 = vand.u32 %v262, 4294901760
    %v1064 = vsub.f32 %v262, %v1063
    %v1065 = vand.u32 %v1064, 4294901760
    %1066 = vmatpush1.msra.mxu0 %v1065
    %1067 = vmatprep.subr.mxu0 0.0
    %v1068 = vand.u32 %v263, 4294901760
    %v1069 = vsub.f32 %v263, %v1068
    %v1070 = vand.u32 %v1069, 4294901760
    %1071 = vmatpush1.msra.mxu0 %v1070
    %1072 = vmatprep.subr.mxu0 0.0
    %v1073 = vand.u32 %v264, 4294901760
    %v1074 = vsub.f32 %v264, %v1073
    %v1075 = vand.u32 %v1074, 4294901760
    %1076 = vmatpush1.msra.mxu0 %v1075
    %1077 = vmatprep.subr.mxu0 0.0
    %v1078 = vand.u32 %v265, 4294901760
    %v1079 = vsub.f32 %v265, %v1078
    %v1080 = vand.u32 %v1079, 4294901760
    %1081 = vmatpush1.msra.mxu0 %v1080
    %1082 = vmatprep.subr.mxu0 0.0
    %v1083 = vand.u32 %v266, 4294901760
    %v1084 = vsub.f32 %v266, %v1083
    %v1085 = vand.u32 %v1084, 4294901760
    %1086 = vmatpush1.msra.mxu0 %v1085
    %1087 = vmatprep.subr.mxu0 0.0
    %v1088 = vand.u32 %v267, 4294901760
    %v1089 = vsub.f32 %v267, %v1088
    %v1090 = vand.u32 %v1089, 4294901760
    %1091 = vmatpush1.msra.mxu0 %v1090
    %1092 = vmatprep.subr.mxu0 0.0
    %v1093 = vand.u32 %v268, 4294901760
    %v1094 = vsub.f32 %v268, %v1093
    %v1095 = vand.u32 %v1094, 4294901760
    %1096 = vmatpush1.msra.mxu0 %v1095
    %1097 = vmatprep.subr.mxu0 0.0
    %v1098 = vand.u32 %v269, 4294901760
    %v1099 = vsub.f32 %v269, %v1098
    %v1100 = vand.u32 %v1099, 4294901760
    %1101 = vmatpush1.msra.mxu0 %v1100
    %1102 = vmatprep.subr.mxu0 0.0
    %v1103 = vand.u32 %v270, 4294901760
    %v1104 = vsub.f32 %v270, %v1103
    %v1105 = vand.u32 %v1104, 4294901760
    %1106 = vmatpush1.msra.mxu0 %v1105
    %1107 = vmatprep.subr.mxu0 0.0
    %v1108 = vand.u32 %v271, 4294901760
    %v1109 = vsub.f32 %v271, %v1108
    %v1110 = vand.u32 %v1109, 4294901760
    %1111 = vmatpush1.msra.mxu0 %v1110
    %1112 = vmatprep.subr.mxu0 0.0
    %v1113 = vand.u32 %v272, 4294901760
    %v1114 = vsub.f32 %v272, %v1113
    %v1115 = vand.u32 %v1114, 4294901760
    %1116 = vmatpush1.msra.mxu0 %v1115
    %1117 = vmatprep.subr.mxu0 0.0
    %v1118 = vand.u32 %v273, 4294901760
    %v1119 = vsub.f32 %v273, %v1118
    %v1120 = vand.u32 %v1119, 4294901760
    %1121 = vmatpush1.msra.mxu0 %v1120
    %1122 = vmatprep.subr.mxu0 0.0
    %v1123 = vand.u32 %v274, 4294901760
    %v1124 = vsub.f32 %v274, %v1123
    %v1125 = vand.u32 %v1124, 4294901760
    %1126 = vmatpush1.msra.mxu0 %v1125
    %1127 = vmatprep.subr.mxu0 0.0
    %v1128 = vand.u32 %v275, 4294901760
    %v1129 = vsub.f32 %v275, %v1128
    %v1130 = vand.u32 %v1129, 4294901760
    %1131 = vmatpush1.msra.mxu0 %v1130
    %1132 = vmatprep.subr.mxu0 0.0
    %v1133 = vand.u32 %v276, 4294901760
    %v1134 = vsub.f32 %v276, %v1133
    %v1135 = vand.u32 %v1134, 4294901760
    %1136 = vmatpush1.msra.mxu0 %v1135
    %1137 = vmatprep.subr.mxu0 0.0
    %v1138 = vand.u32 %v277, 4294901760
    %v1139 = vsub.f32 %v277, %v1138
    %v1140 = vand.u32 %v1139, 4294901760
    %1141 = vmatpush1.msra.mxu0 %v1140
    %1142 = vmatprep.subr.mxu0 0.0
    %v1143 = vand.u32 %v278, 4294901760
    %v1144 = vsub.f32 %v278, %v1143
    %v1145 = vand.u32 %v1144, 4294901760
    %1146 = vmatpush1.msra.mxu0 %v1145
    %1147 = vmatprep.subr.mxu0 0.0
    %v1148 = vand.u32 %v279, 4294901760
    %v1149 = vsub.f32 %v279, %v1148
    %v1150 = vand.u32 %v1149, 4294901760
    %1151 = vmatpush1.msra.mxu0 %v1150
    %1152 = vmatprep.subr.mxu0 0.0
    %v1153 = vand.u32 %v280, 4294901760
    %v1154 = vsub.f32 %v280, %v1153
    %v1155 = vand.u32 %v1154, 4294901760
    %1156 = vmatpush1.msra.mxu0 %v1155
    %v1157 = vand.u32 %v242, 4294901760
    %1158 = vmatprep.mubr.f32.mxu0 %v1157
    %v1159 = vand.u32 %v241, 4294901760
    %1160 = vmatmul.mubr.f32.gmra.mrb[0].mxu0 %v1159
    %v1161 = vpop.f32.mrb[0].mxu0
    %v1162 = vadd.f32 %v961, %v1161
    %v1163 = vpop.f32.mrb[0].mxu0
    %v1164 = vand.u32 %v244, 4294901760
    %1165 = vmatprep.mubr.f32.mxu0 %v1164
    %v1166 = vand.u32 %v243, 4294901760
    %1167 = vmatmul.mubr.f32.gmra.mrb[0].mxu0 %v1166
    %v1168 = vpop.f32.mrb[0].mxu0
    %v1169 = vadd.f32 %v972, %v1168
    %v1170 = vpop.f32.mrb[0].mxu0
    %v1171 = vand.u32 %v246, 4294901760
    %1172 = vmatprep.mubr.f32.mxu0 %v1171
    %v1173 = vand.u32 %v245, 4294901760
    %1174 = vmatmul.mubr.f32.gmra.mrb[0].mxu0 %v1173
    %v1175 = vpop.f32.mrb[0].mxu0
    %v1176 = vadd.f32 %v983, %v1175
    %v1177 = vpop.f32.mrb[0].mxu0
    %v1178 = vand.u32 %v248, 4294901760
    %1179 = vmatprep.mubr.f32.mxu0 %v1178
    %v1180 = vand.u32 %v247, 4294901760
    %1181 = vmatmul.mubr.f32.gmra.mrb[0].mxu0 %v1180
    %v1182 = vpop.f32.mrb[0].mxu0
    %v1183 = vadd.f32 %v994, %v1182
    %v1184 = vpop.f32.mrb[0].mxu0
    %1185 = vdwg.mxu0
    %1186 = vmatprep.subr.mxu0 0.0
    %v1187 = vand.u32 %v249, 4294901760
    %1188 = vmatpush1.msra.mxu0 %v1187
    %1189 = vmatprep.subr.mxu0 0.0
    %v1190 = vand.u32 %v250, 4294901760
    %1191 = vmatpush1.msra.mxu0 %v1190
    %1192 = vmatprep.subr.mxu0 0.0
    %v1193 = vand.u32 %v251, 4294901760
    %1194 = vmatpush1.msra.mxu0 %v1193
    %1195 = vmatprep.subr.mxu0 0.0
    %v1196 = vand.u32 %v252, 4294901760
    %1197 = vmatpush1.msra.mxu0 %v1196
    %1198 = vmatprep.subr.mxu0 0.0
    %v1199 = vand.u32 %v253, 4294901760
    %1200 = vmatpush1.msra.mxu0 %v1199
    %1201 = vmatprep.subr.mxu0 0.0
    %v1202 = vand.u32 %v254, 4294901760
    %1203 = vmatpush1.msra.mxu0 %v1202
    %1204 = vmatprep.subr.mxu0 0.0
    %v1205 = vand.u32 %v255, 4294901760
    %1206 = vmatpush1.msra.mxu0 %v1205
    %1207 = vmatprep.subr.mxu0 0.0
    %v1208 = vand.u32 %v256, 4294901760
    %1209 = vmatpush1.msra.mxu0 %v1208
    %1210 = vmatprep.subr.mxu0 0.0
    %v1211 = vand.u32 %v257, 4294901760
    %1212 = vmatpush1.msra.mxu0 %v1211
    %1213 = vmatprep.subr.mxu0 0.0
    %v1214 = vand.u32 %v258, 4294901760
    %1215 = vmatpush1.msra.mxu0 %v1214
    %1216 = vmatprep.subr.mxu0 0.0
    %v1217 = vand.u32 %v259, 4294901760
    %1218 = vmatpush1.msra.mxu0 %v1217
    %1219 = vmatprep.subr.mxu0 0.0
    %v1220 = vand.u32 %v260, 4294901760
    %1221 = vmatpush1.msra.mxu0 %v1220
    %1222 = vmatprep.subr.mxu0 0.0
    %v1223 = vand.u32 %v261, 4294901760
    %1224 = vmatpush1.msra.mxu0 %v1223
    %1225 = vmatprep.subr.mxu0 0.0
    %v1226 = vand.u32 %v262, 4294901760
    %1227 = vmatpush1.msra.mxu0 %v1226
    %1228 = vmatprep.subr.mxu0 0.0
    %v1229 = vand.u32 %v263, 4294901760
    %1230 = vmatpush1.msra.mxu0 %v1229
    %1231 = vmatprep.subr.mxu0 0.0
    %v1232 = vand.u32 %v264, 4294901760
    %1233 = vmatpush1.msra.mxu0 %v1232
    %1234 = vmatprep.subr.mxu0 0.0
    %v1235 = vand.u32 %v265, 4294901760
    %1236 = vmatpush1.msra.mxu0 %v1235
    %1237 = vmatprep.subr.mxu0 0.0
    %v1238 = vand.u32 %v266, 4294901760
    %1239 = vmatpush1.msra.mxu0 %v1238
    %1240 = vmatprep.subr.mxu0 0.0
    %v1241 = vand.u32 %v267, 4294901760
    %1242 = vmatpush1.msra.mxu0 %v1241
    %1243 = vmatprep.subr.mxu0 0.0
    %v1244 = vand.u32 %v268, 4294901760
    %1245 = vmatpush1.msra.mxu0 %v1244
    %1246 = vmatprep.subr.mxu0 0.0
    %v1247 = vand.u32 %v269, 4294901760
    %1248 = vmatpush1.msra.mxu0 %v1247
    %1249 = vmatprep.subr.mxu0 0.0
    %v1250 = vand.u32 %v270, 4294901760
    %1251 = vmatpush1.msra.mxu0 %v1250
    %1252 = vmatprep.subr.mxu0 0.0
    %v1253 = vand.u32 %v271, 4294901760
    %1254 = vmatpush1.msra.mxu0 %v1253
    %1255 = vmatprep.subr.mxu0 0.0
    %v1256 = vand.u32 %v272, 4294901760
    %1257 = vmatpush1.msra.mxu0 %v1256
    %1258 = vmatprep.subr.mxu0 0.0
    %v1259 = vand.u32 %v273, 4294901760
    %1260 = vmatpush1.msra.mxu0 %v1259
    %1261 = vmatprep.subr.mxu0 0.0
    %v1262 = vand.u32 %v274, 4294901760
    %1263 = vmatpush1.msra.mxu0 %v1262
    %1264 = vmatprep.subr.mxu0 0.0
    %v1265 = vand.u32 %v275, 4294901760
    %1266 = vmatpush1.msra.mxu0 %v1265
    %1267 = vmatprep.subr.mxu0 0.0
    %v1268 = vand.u32 %v276, 4294901760
    %1269 = vmatpush1.msra.mxu0 %v1268
    %1270 = vmatprep.subr.mxu0 0.0
    %v1271 = vand.u32 %v277, 4294901760
    %1272 = vmatpush1.msra.mxu0 %v1271
    %1273 = vmatprep.subr.mxu0 0.0
    %v1274 = vand.u32 %v278, 4294901760
    %1275 = vmatpush1.msra.mxu0 %v1274
    %1276 = vmatprep.subr.mxu0 0.0
    %v1277 = vand.u32 %v279, 4294901760
    %1278 = vmatpush1.msra.mxu0 %v1277
    %1279 = vmatprep.subr.mxu0 0.0
    %v1280 = vand.u32 %v280, 4294901760
    %1281 = vmatpush1.msra.mxu0 %v1280
    %v1282 = vand.u32 %v242, 4294901760
    %1283 = vmatprep.mubr.f32.mxu0 %v1282
    %v1284 = vand.u32 %v241, 4294901760
    %1285 = vmatmul.mubr.f32.gmra.mrb[0].mxu0 %v1284
    %v1286 = vpop.f32.mrb[0].mxu0
    %v1287 = vadd.f32 %v1162, %v1286
    %v1288 = vpop.f32.mrb[0].mxu0
    %v1289 = vand.u32 %v244, 4294901760
    %1290 = vmatprep.mubr.f32.mxu0 %v1289
    %v1291 = vand.u32 %v243, 4294901760
    %1292 = vmatmul.mubr.f32.gmra.mrb[0].mxu0 %v1291
    %v1293 = vpop.f32.mrb[0].mxu0
    %v1294 = vadd.f32 %v1169, %v1293
    %v1295 = vpop.f32.mrb[0].mxu0
    %v1296 = vand.u32 %v246, 4294901760
    %1297 = vmatprep.mubr.f32.mxu0 %v1296
    %v1298 = vand.u32 %v245, 4294901760
    %1299 = vmatmul.mubr.f32.gmra.mrb[0].mxu0 %v1298
    %v1300 = vpop.f32.mrb[0].mxu0
    %v1301 = vadd.f32 %v1176, %v1300
    %v1302 = vpop.f32.mrb[0].mxu0
    %v1303 = vand.u32 %v248, 4294901760
    %1304 = vmatprep.mubr.f32.mxu0 %v1303
    %v1305 = vand.u32 %v247, 4294901760
    %1306 = vmatmul.mubr.f32.gmra.mrb[0].mxu0 %v1305
    %v1307 = vpop.f32.mrb[0].mxu0
    %v1308 = vadd.f32 %v1183, %v1307
    %v1309 = vpop.f32.mrb[0].mxu0
    %1310 = vdwg.mxu0
    %1311 = vst [vmem:[#allocation5] sm:$0xff] %v1287
    %1312 = vst [vmem:[#allocation5 + $0x8] sm:$0xff] %v1294
    %1313 = vst [vmem:[#allocation5 + $0x10] sm:$0xff] %v1301
    %1314 = vst [vmem:[#allocation5 + $0x18] sm:$0xff] %v1308
    // Predicated region
    $region14: #{tpu_custom_call.1} parent=1 // pred_check
      _
    $region15: #{tpu_custom_call.1} parent=1 // pred_check_branch
      %1316 = sbr.rel (0) target = $region17
    $region16: #{tpu_custom_call.1} parent=1 // pred_region
      %s1318 = ssub.s32 512, 512
      %1319 = vsyncadd [#allocation4], %s1318
      %s1320 = sshll.u32 [#allocation5], 4
      %s1321 = int_to_ptr.vmem [resolvable:$true] %s1320
      %1326 = dma.vmem_to_hbm [thread:$0]  %s1321, 512, %s2, [#allocation4], 128, 128, 8
    $region17: #{tpu_custom_call.1} parent=1 // pred_fallthru
      _
    // Predicated region
    $region18: #{tpu_custom_call.1} parent=1 // pred_check
      _
    $region19: #{tpu_custom_call.1} parent=1 // pred_check_branch
      %1328 = sbr.rel (0) target = $region21
    $region20: #{tpu_custom_call.1} parent=1 // pred_region
      %1329 = dma.done [#allocation4], 512
    $region21: #{tpu_custom_call.1} parent=1 // pred_fallthru
      _
    %1330 = vsyncpa [#allocation3], 1
    %1331 = vsyncpa [#allocation4], 1

</llo_original>
